<compile_context>
chip_gen: v7x
topology: tpu7x:2x2x1
jax: 0.10.0
libtpu: 0.0.40
codegen_flags: <defaults>
</compile_context>

<pallas_src>
import functools

import jax
import jax.numpy as jnp
import numpy as np
from jax.experimental import pallas as pl
from jax.experimental.pallas import tpu as pltpu

_EPS = float(np.finfo(np.float32).eps)


def _round_up(x, m):
    return (x + m - 1) // m * m


def _pick_tile(dim_p, cap):
    """Largest multiple of 128 that divides dim_p (a multiple of 128) and is
    <= cap (floored at 128)."""
    best = 128
    t = 128
    hi = min(dim_p, max(128, cap))
    while t <= hi:
        if dim_p % t == 0:
            best = t
        t += 128
    return best


@functools.lru_cache(maxsize=None)
def _vmem_limit_bytes():
    """Per-generation scoped-VMEM budget (leave headroom for Mosaic scratch)."""
    cap = 64 * 1024 * 1024
    try:
        info = pltpu.get_tpu_info()
        c = getattr(info, "vmem_capacity_bytes", 0)
        if c:
            cap = int(c)
    except Exception:
        pass
    return max(32 * 1024 * 1024, min(cap * 3 // 4, 96 * 1024 * 1024))


# ----------------------------- Pallas kernels ------------------------------ #

def _wqdq_kernel(w_ref, o_ref):
    """Symmetric int8 fake-quant of a pre-scaled [Kp, tn] weight slab
    (per output column == per output channel)."""
    w = w_ref[...]
    absmax = jnp.max(jnp.abs(w), axis=0, keepdims=True)          # [1, tn]
    s = jnp.maximum(absmax * (1.0 / 127.5), _EPS)                # absmax/((qmax-qmin)/2)
    q = jnp.clip(jnp.round(w * (1.0 / s)), -128.0, 127.0)
    o_ref[...] = (q * s).astype(o_ref.dtype)                     # bf16 [Kp, tn]


def _xqdq_kernel(params_ref, x_ref, row_ref, o_ref):
    """Per-tensor asymmetric uint8 fake-quant of the activation.

    row = input_scale / s (folded), params = [zp, s, s*zp, 0] in SMEM.
    x_dq = s * (clip(round(x*row + zp), 0, 255) - zp) = q*s - s*zp
    """
    zp = params_ref[0]
    s = params_ref[1]
    s_zp = params_ref[2]
    q = jnp.clip(jnp.round(x_ref[...] * row_ref[...] + zp), 0.0, 255.0)
    o_ref[...] = (q * s - s_zp).astype(o_ref.dtype)               # bf16 [tm, tk]


def _matmul_bias_kernel(x_ref, w_ref, b_ref, o_ref, acc_ref):
    """Tiled (i, j, k) matmul + bias, f32 accumulator, pure MXU inner loop."""
    k = pl.program_id(2)

    @pl.when(k == 0)
    def _init():
        acc_ref[...] = jnp.zeros_like(acc_ref)

    acc_ref[...] += jnp.dot(x_ref[...], w_ref[...],
                            preferred_element_type=jnp.float32)

    @pl.when(k == pl.num_programs(2) - 1)
    def _fin():
        o_ref[...] = (acc_ref[...] + b_ref[...]).astype(o_ref.dtype)


# ------------------------------ JAX wrappers ------------------------------- #

_SMEM_SPEC = pl.BlockSpec(memory_space=pltpu.MemorySpace.SMEM)


@functools.partial(jax.jit, static_argnames=("tn",))
def _weight_qdq(w_scaled_t, *, tn):
    Kp, Np = w_scaled_t.shape
    return pl.pallas_call(
        _wqdq_kernel,
        out_shape=jax.ShapeDtypeStruct((Kp, Np), jnp.bfloat16),
        grid=(Np // tn,),
        in_specs=[pl.BlockSpec((Kp, tn), lambda j: (0, j))],
        out_specs=pl.BlockSpec((Kp, tn), lambda j: (0, j)),
        compiler_params=pltpu.CompilerParams(
            dimension_semantics=("parallel",),
            vmem_limit_bytes=_vmem_limit_bytes()),
        cost_estimate=pl.CostEstimate(
            flops=int(6 * Kp * Np), transcendentals=0,
            bytes_accessed=int(Kp * Np * 4 + Kp * Np * 2)),
    )(w_scaled_t)


@functools.partial(jax.jit, static_argnames=("tm", "tk"))
def _activation_qdq(params, x2d, row, *, tm, tk):
    M, Kp = x2d.shape
    return pl.pallas_call(
        _xqdq_kernel,
        out_shape=jax.ShapeDtypeStruct((M, Kp), jnp.bfloat16),
        grid=(pl.cdiv(M, tm), Kp // tk),
        in_specs=[_SMEM_SPEC,                                     # params (4,)
                  pl.BlockSpec((tm, tk), lambda i, k: (i, k)),    # x f32
                  pl.BlockSpec((1, tk), lambda i, k: (0, k))],    # folded scale row
        out_specs=pl.BlockSpec((tm, tk), lambda i, k: (i, k)),
        compiler_params=pltpu.CompilerParams(
            dimension_semantics=("parallel", "parallel"),
            vmem_limit_bytes=_vmem_limit_bytes()),
        cost_estimate=pl.CostEstimate(
            flops=int(5 * M * Kp), transcendentals=0,
            bytes_accessed=int(M * Kp * 4 + M * Kp * 2 + Kp * 4)),
    )(params, x2d, row)


@functools.partial(jax.jit, static_argnames=("tm", "tn", "tk"))
def _linear_bias(x2d, w_t, bias_row, *, tm, tn, tk):
    """out[M, Np] = x2d[M, Kp] @ w_t[Kp, Np] + bias_row[1, Np] (f32 out)."""
    M, Kp = x2d.shape
    Np = w_t.shape[1]
    n_i, n_j, n_k = pl.cdiv(M, tm), Np // tn, Kp // tk
    xb = int(jnp.dtype(x2d.dtype).itemsize)
    wb = int(jnp.dtype(w_t.dtype).itemsize)
    return pl.pallas_call(
        _matmul_bias_kernel,
        out_shape=jax.ShapeDtypeStruct((M, Np), jnp.float32),
        grid=(n_i, n_j, n_k),
        in_specs=[pl.BlockSpec((tm, tk), lambda i, j, k: (i, k)),
                  pl.BlockSpec((tk, tn), lambda i, j, k: (k, j)),
                  pl.BlockSpec((1, tn), lambda i, j, k: (0, j))],
        out_specs=pl.BlockSpec((tm, tn), lambda i, j, k: (i, j)),
        scratch_shapes=[pltpu.VMEM((tm, tn), jnp.float32)],
        compiler_params=pltpu.CompilerParams(
            dimension_semantics=("parallel", "parallel", "arbitrary"),
            vmem_limit_bytes=_vmem_limit_bytes()),
        cost_estimate=pl.CostEstimate(
            flops=int(2 * M * Np * Kp), transcendentals=0,
            bytes_accessed=int(M * Kp * xb * n_j + Kp * Np * wb * n_i
                               + M * Np * 4)),
    )(x2d, w_t, bias_row)


# -------------------------------- the layer -------------------------------- #

class WrapperLayerPallas:
    """JAX/Pallas port of neural_compressor's WrapperLayer around nn.Linear."""

    def __init__(self, weight, bias, input_min, input_max, save_q_input=False,
                 block_m=512, block_n=1024, block_k=1024):
        self.N, self.K = int(weight.shape[0]), int(weight.shape[1])
        # Pad to the 128-lane grid (NOT to the block size): no wasted MXU work.
        self._Np = _round_up(self.N, 128)
        self._Kp = _round_up(self.K, 128)

        limit = _vmem_limit_bytes()
        budget = int(limit * 0.7)
        # Per-generation tile caps: 128 MiB VMEM chips (v5e/v6e) take bigger
        # tiles; 64 MiB chips (v7x) stay at 512 and keep megacore headroom.
        cap_nk = 1024 if limit >= 64 * 1024 * 1024 else 512
        self._bn = _pick_tile(self._Np, min(max(128, _round_up(block_n, 128)), cap_nk))
        self._bk = _pick_tile(self._Kp, min(max(128, _round_up(block_k, 128)), cap_nk))
        self._bm_cap = max(16, _round_up(min(block_m, 512), 16))

        # Shrink until the worst-case (f32) double-buffered working set fits.
        def _fp(tm, tn, tk):
            return (2 * tm * tk * 4 + 2 * tk * tn * 4 + 3 * tm * tn * 4
                    + 2 * tn * 4)
        while _fp(self._bm_cap, self._bn, self._bk) > budget:
            if self._bk >= self._bn and self._bk > 128:
                self._bk = _pick_tile(self._Kp, self._bk - 128)
            elif self._bn > 128:
                self._bn = _pick_tile(self._Np, self._bn - 128)
            elif self._bm_cap > 64:
                self._bm_cap = max(64, self._bm_cap - 64)
            else:
                break

        # Weight fake-quant needs full-K slabs (per-column absmax): bound its
        # N tile so 2 x (f32 in + bf16 out) slabs stay well inside VMEM (v7x).
        tnw = min(512, max(128, _round_up(block_n, 128)))
        while tnw > 128 and 12 * self._Kp * tnw > budget // 2:
            tnw -= 128
        self._bnw = _pick_tile(self._Np, tnw)

        # Static per-layer prep: pad + transpose the weight once to [Kp, Np].
        w = jnp.asarray(weight, jnp.float32)
        if (self._Np, self._Kp) != (self.N, self.K):
            w = jnp.pad(w, ((0, self._Np - self.N), (0, self._Kp - self.K)))
        self.weight_t = jnp.transpose(w)                         # [Kp, Np] f32
        # TODO(synk): optionally keep weight_t in bf16 for the quant=False path
        # (f32 matmul is multi-pass MXU); kept f32 for fp32 nn.Linear parity.
        b = jnp.asarray(bias, jnp.float32)
        if self._Np != self.N:
            b = jnp.pad(b, (0, self._Np - self.N))
        self.bias_row = b.reshape(1, self._Np)

        self.weight = weight
        self.bias = bias
        self.input_min = jnp.asarray(input_min, jnp.float32)     # [K]
        self.input_max = jnp.asarray(input_max, jnp.float32)     # [K]
        self.quant = False
        self.save_q_input = save_q_input
        self.q_input = None
        self.output = None
        self.input_scale = None
        self.weight_scale = None
        self._w_cache = None        # bf16 [Kp, Np] fake-quantized weight
        self._act_cache = None      # (params [4] f32, row [1, Kp] f32)
        self._act_key = None

    def enable_quant(self):
        self.quant = True

    def disable_quant(self):
        self.quant = False

    def update_scale(self, input_scale, weight_scale):
        self.input_scale = input_scale
        self.weight_scale = weight_scale
        self._w_cache = None
        self._act_cache = None

    # ---- activation-independent quant prep (cached across forwards) ---- #

    def _weight_dq(self):
        if self._w_cache is None:
            if self.weight_scale is None:
                w_scaled = self.weight_t
            else:
                col = jnp.zeros((self._Kp, 1), jnp.float32)
                col = col.at[:self.K, 0].set(
                    jnp.asarray(self.weight_scale, jnp.float32))
                w_scaled = self.weight_t * col      # plain XLA, once per update
            self._w_cache = _weight_qdq(w_scaled, tn=self._bnw)
        return self._w_cache

    def _act_quant_params(self):
        key = (id(self.input_scale), id(self.input_min), id(self.input_max))
        if self._act_cache is None or self._act_key != key:
            K, Kp = self.K, self._Kp
            i_scale = (jnp.asarray(self.input_scale, jnp.float32)
                       if self.input_scale is not None
                       else jnp.ones((K,), jnp.float32))
            max_x = jnp.max(self.input_max * i_scale)
            min_x = jnp.min(self.input_min * i_scale)
            s = jnp.maximum((max_x - min_x) / 255.0, _EPS)
            zp = jnp.round((0.0 - min_x) / s)
            row = jnp.zeros((1, Kp), jnp.float32)
            row = row.at[0, :K].set(i_scale / s)    # fold 1/s into the row
            params = jnp.stack([zp, s, s * zp, jnp.zeros((), jnp.float32)])
            self._act_cache = (params.astype(jnp.float32), row)
            self._act_key = key
        return self._act_cache

    def __call__(self, x):
        B, S, K = x.shape
        assert K == self.K
        M = B * S
        x2d = jnp.asarray(x, jnp.float32).reshape(M, K)
        if K != self._Kp:                            # zero-pad the K tail only
            x2d = jnp.pad(x2d, ((0, 0), (0, self._Kp - K)))

        if self.quant:
            if self.save_q_input:
                self.q_input = x
            params, row = self._act_quant_params()
            w_dq_t = self._weight_dq()
            tmq = min(512, max(16, _round_up(M, 16)))
            tkq = _pick_tile(self._Kp, 2048)
            x_dq = _activation_qdq(params, x2d, row, tm=tmq, tk=tkq)
            tm = min(self._bm_cap, max(16, _round_up(M, 16)))   # bf16 -> 16 rows
            out_p = _linear_bias(x_dq, w_dq_t, self.bias_row,
                                 tm=tm, tn=self._bn, tk=self._bk)
        else:
            tm = min(self._bm_cap, max(8, _round_up(M, 8)))
            out_p = _linear_bias(x2d, self.weight_t, self.bias_row,
                                 tm=tm, tn=self._bn, tk=self._bk)

        out = out_p[:, :self.N].reshape(B, S, self.N)
        self.output = out
        return out


# ------------------------------ pure-JAX refs ------------------------------ #

def _ref_qdq_tensors(x, weight, input_min, input_max, input_scale, weight_scale):
    w = weight * weight_scale[None, :]
    absmax = jnp.max(jnp.abs(w), axis=1, keepdims=True)
    w_s = jnp.maximum(absmax / 127.5, _EPS)
    w_dq = jnp.clip(jnp.round(w * (1.0 / w_s)), -128.0, 127.0) * w_s

    max_x = jnp.max(input_max * input_scale)
    min_x = jnp.min(input_min * input_scale)
    s = jnp.maximum((max_x - min_x) / 255.0, _EPS)
    zp = jnp.round(-min_x / s)
    row = input_scale / s
    q = jnp.clip(jnp.round(x * row + zp), 0.0, 255.0)
    x_dq = q * s - s * zp
    return x_dq, w_dq


def _ref_qdq_forward_bf16(x, weight, bias, input_min, input_max,
                          input_scale, weight_scale):
    x_dq, w_dq = _ref_qdq_tensors(x, weight, input_min, input_max,
                                  input_scale, weight_scale)
    return jnp.einsum("bsk,nk->bsn", x_dq.astype(jnp.bfloat16),
                      w_dq.astype(jnp.bfloat16),
                      preferred_element_type=jnp.float32) + bias


def _ref_qdq_forward_f32(x, weight, bias, input_min, input_max,
                         input_scale, weight_scale):
    x_dq, w_dq = _ref_qdq_tensors(x, weight, input_min, input_max,
                                  input_scale, weight_scale)
    return jnp.einsum("bsk,nk->bsn", x_dq, w_dq,
                      precision=jax.lax.Precision.HIGHEST) + bias


# ---------------------------------- main ----------------------------------- #

if __name__ == "__main__":
    key = jax.random.PRNGKey(0)
    kx, kw, kb, kmn, kmx, kis = jax.random.split(key, 6)

    # Small but multi-tile: matmul grid (1, 2, 3); weight-qdq grid (2,).
    B, S, K, N = 2, 8, 384, 256

    x = jax.random.normal(kx, (B, S, K), dtype=jnp.float32)
    weight = jax.random.normal(kw, (N, K), dtype=jnp.float32) * 0.05
    bias = jax.random.normal(kb, (N,), dtype=jnp.float32) * 0.1
    input_min = -jnp.abs(jax.random.normal(kmn, (K,), dtype=jnp.float32)) - 0.5
    input_max = jnp.abs(jax.random.normal(kmx, (K,), dtype=jnp.float32)) + 0.5
    input_scale = jnp.abs(jax.random.normal(kis, (K,), dtype=jnp.float32)) + 0.5
    weight_scale = 1.0 / input_scale     # typical smooth-quant pairing

    layer = WrapperLayerPallas(weight, bias, input_min, input_max,
                               save_q_input=True,
                               block_m=256, block_n=128, block_k=128)

    # quant disabled -> plain f32 Linear.
    out_fp32 = layer(x)
    jax.block_until_ready(out_fp32)
    ref_fp32 = jnp.einsum("bsk,nk->bsn", x, weight,
                          precision=jax.lax.Precision.HIGHEST) + bias
    np.testing.assert_allclose(np.asarray(out_fp32), np.asarray(ref_fp32),
                               rtol=1e-4, atol=1e-4)

    # quant enabled with smooth-quant scales.
    layer.update_scale(input_scale, weight_scale)
    layer.enable_quant()
    out_q = layer(x)
    jax.block_until_ready(out_q)
    ref_q_bf16 = _ref_qdq_forward_bf16(x, weight, bias, input_min, input_max,
                                       input_scale, weight_scale)
    np.testing.assert_allclose(np.asarray(out_q), np.asarray(ref_q_bf16),
                               rtol=2e-2, atol=2e-2)
    ref_q_f32 = _ref_qdq_forward_f32(x, weight, bias, input_min, input_max,
                                     input_scale, weight_scale)
    np.testing.assert_allclose(np.asarray(out_q), np.asarray(ref_q_f32),
                               rtol=1e-1, atol=1e-1)

    # Second call reuses the cached fake-quantized weight / activation params.
    out_q_again = layer(x)
    jax.block_until_ready(out_q_again)
    np.testing.assert_allclose(np.asarray(out_q_again), np.asarray(out_q),
                               rtol=0, atol=0)

    # quant path with no scales (input_scale / weight_scale = None).
    layer.update_scale(None, None)
    out_q2 = layer(x)
    jax.block_until_ready(out_q2)
    ones = jnp.ones((K,), jnp.float32)
    ref_q2 = _ref_qdq_forward_bf16(x, weight, bias, input_min, input_max,
                                   ones, ones)
    np.testing.assert_allclose(np.asarray(out_q2), np.asarray(ref_q2),
                               rtol=2e-2, atol=2e-2)

    print("KERNEL_OK")
</pallas_src>

<mosaic_0001>
module attributes {stable_mosaic.version = 11 : i64} {
  func.func @_matmul_bias_kernel(%arg0: i32, %arg1: i32, %arg2: i32, %arg3: memref<16x128xf32, #tpu.memory_space<vmem>>, %arg4: memref<128x128xf32, #tpu.memory_space<vmem>>, %arg5: memref<1x128xf32, #tpu.memory_space<vmem>>, %arg6: memref<16x128xf32, #tpu.memory_space<vmem>>, %arg7: memref<16x128xf32, #tpu.memory_space<vmem>>) attributes {dimension_semantics = [#tpu.dimension_semantics<parallel>, #tpu.dimension_semantics<parallel>, #tpu.dimension_semantics<arbitrary>], iteration_bounds = array<i64: 1, 2, 3>, scalar_prefetch = 0 : i64, scratch_operands = 1 : i64, tpu.core_type = #tpu.core_type<tc>, window_params = [{transform_indices = @transform_0, window_bounds = array<i64: 16, 128>}, {transform_indices = @transform_1, window_bounds = array<i64: 128, 128>}, {transform_indices = @transform_2, window_bounds = array<i64: 1, 128>}, {transform_indices = @transform_3, window_bounds = array<i64: 16, 128>}]} {
    %c0_i32 = arith.constant 0 : i32
    %0 = arith.cmpi eq, %arg2, %c0_i32 : i32
    %1 = arith.extui %0 : i1 to i32
    %c0_i32_0 = arith.constant 0 : i32
    %2 = arith.cmpi ne, %1, %c0_i32_0 : i32
    scf.if %2 {
      %cst_9 = arith.constant 0.000000e+00 : f32
      %12 = vector.broadcast %cst_9 : f32 to vector<16x128xf32>
      %c0_10 = arith.constant 0 : index
      %c0_11 = arith.constant 0 : index
      %13 = vector.load %arg7[%c0_10, %c0_11] : memref<16x128xf32, #tpu.memory_space<vmem>>, vector<16x128xf32>
      tpu.vector_store %arg7[%c0_10, %c0_11], %12 {strides = array<i32>} : memref<16x128xf32, #tpu.memory_space<vmem>>, vector<16x128xf32>,
    } else {
    }
    %c0 = arith.constant 0 : index
    %c0_1 = arith.constant 0 : index
    %3 = vector.load %arg7[%c0, %c0_1] : memref<16x128xf32, #tpu.memory_space<vmem>>, vector<16x128xf32>
    %c0_2 = arith.constant 0 : index
    %c0_3 = arith.constant 0 : index
    %4 = vector.load %arg3[%c0_2, %c0_3] : memref<16x128xf32, #tpu.memory_space<vmem>>, vector<16x128xf32>
    %c0_4 = arith.constant 0 : index
    %c0_5 = arith.constant 0 : index
    %5 = vector.load %arg4[%c0_4, %c0_5] : memref<128x128xf32, #tpu.memory_space<vmem>>, vector<128x128xf32>
    %cst = arith.constant dense<0.000000e+00> : vector<16x128xf32>
    %6 = tpu.matmul %4, %5, %cst {dimension_numbers = #tpu.dot_dimension_numbers<[1], [0], [0], [1], [0, 0, 1, 1], [], []>} : vector<16x128xf32>, vector<128x128xf32>, vector<16x128xf32> -> vector<16x128xf32>
    %7 = arith.addf %3, %6 : vector<16x128xf32>
    %c0_6 = arith.constant 0 : index
    %c0_7 = arith.constant 0 : index
    %8 = vector.load %arg7[%c0_6, %c0_7] : memref<16x128xf32, #tpu.memory_space<vmem>>, vector<16x128xf32>
    tpu.vector_store %arg7[%c0_6, %c0_7], %7 {strides = array<i32>} : memref<16x128xf32, #tpu.memory_space<vmem>>, vector<16x128xf32>,
    %c2_i32 = arith.constant 2 : i32
    %9 = arith.cmpi eq, %arg2, %c2_i32 : i32
    %10 = arith.extui %9 : i1 to i32
    %c0_i32_8 = arith.constant 0 : i32
    %11 = arith.cmpi ne, %10, %c0_i32_8 : i32
    scf.if %11 {
      %c0_9 = arith.constant 0 : index
      %c0_10 = arith.constant 0 : index
      %12 = vector.load %arg7[%c0_9, %c0_10] : memref<16x128xf32, #tpu.memory_space<vmem>>, vector<16x128xf32>
      %c0_11 = arith.constant 0 : index
      %c0_12 = arith.constant 0 : index
      %13 = vector.load %arg5[%c0_11, %c0_12] : memref<1x128xf32, #tpu.memory_space<vmem>>, vector<1x128xf32>
      %14 = vector.broadcast %13 : vector<1x128xf32> to vector<16x128xf32>
      %15 = arith.addf %12, %14 : vector<16x128xf32>
      %c0_13 = arith.constant 0 : index
      %c0_14 = arith.constant 0 : index
      %16 = vector.load %arg6[%c0_13, %c0_14] : memref<16x128xf32, #tpu.memory_space<vmem>>, vector<16x128xf32>
      tpu.vector_store %arg6[%c0_13, %c0_14], %15 {strides = array<i32>} : memref<16x128xf32, #tpu.memory_space<vmem>>, vector<16x128xf32>,
    } else {
    }
    return
  }
  func.func @transform_0(%arg0: i32, %arg1: i32, %arg2: i32) -> (i32, i32) {
    %c0_i32 = arith.constant 0 : i32
    return %arg0, %arg2 : i32, i32
  }
  func.func @transform_1(%arg0: i32, %arg1: i32, %arg2: i32) -> (i32, i32) {
    %c0_i32 = arith.constant 0 : i32
    return %arg2, %arg1 : i32, i32
  }
  func.func @transform_2(%arg0: i32, %arg1: i32, %arg2: i32) -> (i32, i32) {
    %c0_i32 = arith.constant 0 : i32
    %c0_i32_0 = arith.constant 0 : i32
    return %c0_i32, %arg1 : i32, i32
  }
  func.func @transform_3(%arg0: i32, %arg1: i32, %arg2: i32) -> (i32, i32) {
    %c0_i32 = arith.constant 0 : i32
    return %arg0, %arg1 : i32, i32
  }
}

</mosaic_0001>

<llo_original>
// kernel: _linear_bias.1
$region0: #{_linear_bias.1}
  #allocation0 [shape = 'u32[]', space=smem, size = 0x4, offset = 0x4, fixed_abs, tag = 'smem constant byte address 0x4 - core index']
  #allocation1 [shape = 'u32[144,128]{1,0:T(1,128)}', space=vmem, size = 0x12000, scoped, tag = 'internal scratch']
  #allocation2 [shape = 'f32[16,128]{1,0:T(8,128)}', space=vmem, size = 0x2000, scoped, tag = 'scratch operand']
  %s0 = inlined_call_operand.hbm [shape: f32[16,384], index: 0, kind: input, shape index: {}]
  %s1 = inlined_call_operand.hbm [shape: f32[384,256], index: 1, kind: input, shape index: {}]
  %s2 = inlined_call_operand.vmem [shape: f32[1,256], index: 2, kind: input, shape index: {}]
  %s3 = inlined_call_operand.hbm [shape: f32[16,256], index: 3, kind: output, shape index: {}]
  %s4 = sld [smem:[#allocation0]]
  $region61: #{_linear_bias.1} parent=0
    _
  %s6 = ssub.s32 1, %s4
  %s7 = scalar_select 0, %s6, %s4
  $region1: #{_linear_bias.1} parent=0
    #allocation3 [shape = 'u8[16384]{0}', space=vmem, size = 0x4000, scoped, tag = 'input window, operand 0']
    #allocation4 [shape = 's32[2]{0}', space=sflag, size = 0x8, scoped, tag = 'scoped memory for _linear_bias.1']
    #allocation5 [shape = 's32[2]{0}', space=sflag, size = 0x8, scoped, tag = 'scoped memory for _linear_bias.1']
    #allocation6 [shape = 'u8[131072]{0}', space=vmem, size = 0x20000, scoped, tag = 'input window, operand 1']
    #allocation7 [shape = 's32[2]{0}', space=sflag, size = 0x8, scoped, tag = 'scoped memory for _linear_bias.1']
    #allocation8 [shape = 'u8[16384]{0}', space=vmem, size = 0x4000, scoped, tag = 'output window, operand 0']
    %8 = vsyncpa [#allocation4], 0
    %s9 = scalar_lea.sflag [#allocation4], 1
    %10 = vsyncpa %s9, 0
    %11 = vsyncpa [#allocation7], 0
    %s12 = scalar_lea.sflag [#allocation7], 1
    %13 = vsyncpa %s12, 0
    %14 = vsyncpa [#allocation5], 0
    %s15 = scalar_lea.sflag [#allocation5], 1
    %16 = vsyncpa %s15, 0
    loop: start=0, step=1, limit=8
    $region2: #{_linear_bias.1} parent=1 // loop_pre_header
      _
    $region3: #{_linear_bias.1} parent=1 // loop_header
      %s18 = sphi 0, %s22
      %p19 = scmp.ge.s32.totalorder %s18, 8
      %s25 = sphi 0, %s44
      %s26 = sphi 0, %s40
      %s27 = sphi 0, %s36
      %s28 = sphi 0, %s25
      %s29 = sphi 0, %s26
      %s30 = sphi 0, %s27
      %s31 = sphi 0, %s28
      %s32 = sphi 0, %s29
      %s33 = sphi 0, %s30
      %s49 = sphi 0, %s51
      %s52 = sphi 0, %s49
      %s53 = sphi 0, %s52
      %s69 = sphi 0, %s53
      %s77 = sphi 0, %s79
      %s80 = sphi 0, %s77
      %s81 = sphi 0, %s80
      %s97 = sphi 0, %s81
      %s103 = sphi 0, %s105
      %s106 = sphi 0, %s103
      %s107 = sphi 0, %s106
      %s123 = sphi 0, %s107
      %s131 = sphi 0, %s133
      %s134 = sphi 0, %s131
      %s135 = sphi 0, %s134
      %s151 = sphi 0, %s135
    $region4: #{_linear_bias.1} parent=1 // loop_header_branch
      %21 = sbr.rel (%p19) target = $region8
    $region5: #{_linear_bias.1} parent=1 // loop_body
      %s23 = ssub.s32 %s18, 1
      %s24 = ssub.s32 %s18, 2
      %s34 = sadd.s32 1, %s27
      %p35 = scmp.ge.s32.totalorder %s34, 3
      %s36 = scalar_select %p35, 0, %s34
      %s37 = sadd.s32 1, %s26
      %s38 = scalar_select %p35, %s37, %s26
      %p39 = scmp.ge.s32.totalorder %s38, 2
      %s40 = scalar_select %p39, 0, %s38
      %s41 = sadd.s32 1, %s25
      %s42 = scalar_select %p39, %s41, %s25
      %p43 = scmp.ge.s32.totalorder %s42, 1
      %s44 = scalar_select %p43, 0, %s42
      %s45 = ssub.s32 %s25, %s44
      %s46 = ssub.s32 %s27, %s36
      %s47 = sor.u32 %s45, %s46
      %p48 = scmp.eq.s32.totalorder %s47, 0
      %s50 = sadd.s32 %s49, 1
      %s51 = scalar_select %p48, %s49, %s50
      %p54 = pneg %p48
      %p55 = scmp.eq.s32.totalorder %s18, 5
      %p56 = por %p54, %p55
      %p57 = scmp.ne.s32.totalorder %s49, %s52
      %p58 = scmp.eq.s32.totalorder %s18, 0
      %p59 = por %p57, %p58
      %p60 = scmp.ne.s32.totalorder %s49, %s52
      %p61 = scmp.eq.s32.totalorder %s23, 5
      %p62 = por %p60, %p61
      %p63 = scmp.ne.s32.totalorder %s52, %s53
      %p64 = scmp.eq.s32.totalorder %s23, 0
      %p65 = por %p63, %p64
      %p66 = scmp.ne.s32.totalorder %s52, %s53
      %p67 = scmp.eq.s32.totalorder %s24, 5
      %p68 = por %p66, %p67
      %p70 = scmp.ne.s32.totalorder %s53, %s69
      %p71 = scmp.eq.s32.totalorder %s24, 0
      %p72 = por %p70, %p71
      %s73 = ssub.s32 %s27, %s36
      %s74 = ssub.s32 %s26, %s40
      %s75 = sor.u32 %s73, %s74
      %p76 = scmp.eq.s32.totalorder %s75, 0
      %s78 = sadd.s32 %s77, 1
      %s79 = scalar_select %p76, %s77, %s78
      %p82 = pneg %p76
      %p83 = scmp.eq.s32.totalorder %s18, 5
      %p84 = por %p82, %p83
      %p85 = scmp.ne.s32.totalorder %s77, %s80
      %p86 = scmp.eq.s32.totalorder %s18, 0
      %p87 = por %p85, %p86
      %p88 = scmp.ne.s32.totalorder %s77, %s80
      %p89 = scmp.eq.s32.totalorder %s23, 5
      %p90 = por %p88, %p89
      %p91 = scmp.ne.s32.totalorder %s80, %s81
      %p92 = scmp.eq.s32.totalorder %s23, 0
      %p93 = por %p91, %p92
      %p94 = scmp.ne.s32.totalorder %s80, %s81
      %p95 = scmp.eq.s32.totalorder %s24, 5
      %p96 = por %p94, %p95
      %p98 = scmp.ne.s32.totalorder %s81, %s97
      %p99 = scmp.eq.s32.totalorder %s24, 0
      %p100 = por %p98, %p99
      %s101 = ssub.s32 %s26, %s40
      %p102 = scmp.eq.s32.totalorder %s101, 0
      %s104 = sadd.s32 %s103, 1
      %s105 = scalar_select %p102, %s103, %s104
      %p108 = pneg %p102
      %p109 = scmp.eq.s32.totalorder %s18, 5
      %p110 = por %p108, %p109
      %p111 = scmp.ne.s32.totalorder %s103, %s106
      %p112 = scmp.eq.s32.totalorder %s18, 0
      %p113 = por %p111, %p112
      %p114 = scmp.ne.s32.totalorder %s103, %s106
      %p115 = scmp.eq.s32.totalorder %s23, 5
      %p116 = por %p114, %p115
      %p117 = scmp.ne.s32.totalorder %s106, %s107
      %p118 = scmp.eq.s32.totalorder %s23, 0
      %p119 = por %p117, %p118
      %p120 = scmp.ne.s32.totalorder %s106, %s107
      %p121 = scmp.eq.s32.totalorder %s24, 5
      %p122 = por %p120, %p121
      %p124 = scmp.ne.s32.totalorder %s107, %s123
      %p125 = scmp.eq.s32.totalorder %s24, 0
      %p126 = por %p124, %p125
      %s127 = ssub.s32 %s25, %s44
      %s128 = ssub.s32 %s26, %s40
      %s129 = sor.u32 %s127, %s128
      %p130 = scmp.eq.s32.totalorder %s129, 0
      %s132 = sadd.s32 %s131, 1
      %s133 = scalar_select %p130, %s131, %s132
      %p136 = pneg %p130
      %p137 = scmp.eq.s32.totalorder %s18, 5
      %p138 = por %p136, %p137
      %p139 = scmp.ne.s32.totalorder %s131, %s134
      %p140 = scmp.eq.s32.totalorder %s18, 0
      %p141 = por %p139, %p140
      %p142 = scmp.ne.s32.totalorder %s131, %s134
      %p143 = scmp.eq.s32.totalorder %s23, 5
      %p144 = por %p142, %p143
      %p145 = scmp.ne.s32.totalorder %s134, %s135
      %p146 = scmp.eq.s32.totalorder %s23, 0
      %p147 = por %p145, %p146
      %p148 = scmp.ne.s32.totalorder %s134, %s135
      %p149 = scmp.eq.s32.totalorder %s24, 5
      %p150 = por %p148, %p149
      %p152 = scmp.ne.s32.totalorder %s135, %s151
      %p153 = scmp.eq.s32.totalorder %s24, 0
      %p154 = por %p152, %p153
      %p155 = scmp.le.s32.totalorder 1, %s18
      %p156 = scmp.lt.s32.totalorder %s18, 7
      %p157 = pnand %p155, %p156
      %p158 = pneg %p157
      // Predicated region
      $region9: #{_linear_bias.1} parent=5 // pred_check
        _
      $region10: #{_linear_bias.1} parent=5 // pred_check_branch
        %160 = sbr.rel (%p157) target = $region12
      $region11: #{_linear_bias.1} parent=5 // pred_region
        %s161 = ssub.s32 %s18, 1
      $region12: #{_linear_bias.1} parent=5 // pred_fallthru
        _
      %p162 = scmp.lt.s32.totalorder %s18, 6
      // Predicated region
      $region13: #{_linear_bias.1} parent=5 // pred_check
        %p163 = pneg %p162
      $region14: #{_linear_bias.1} parent=5 // pred_check_branch
        %165 = sbr.rel (%p163) target = $region16
      $region15: #{_linear_bias.1} parent=5 // pred_region
        // Predicated region
        $region17: #{_linear_bias.1} parent=15 // pred_check
          %p166 = pneg %p59
        $region18: #{_linear_bias.1} parent=15 // pred_check_branch
          %168 = sbr.rel (%p166) target = $region20
        $region19: #{_linear_bias.1} parent=15 // pred_region
          %s169 = sand.u32 %s49, 1
          %s170 = scalar_lea.sflag [#allocation4], %s169
          %s171 = sand.u32 %s49, 1
          %s172 = smul.addr %s171, 16
          %s173 = scalar_lea.vmem [#allocation3], %s172
          %s174 = smul.u32 2, %s25
          %s176 = ssub.s32 256, 256
          %177 = vsyncadd %s170, %s176
          %s178 = smul.addr %s174, 3
          %s179 = sadd.s32 %s27, %s178
          %s180 = smul.addr %s179, 128
          %s181 = scalar_lea.hbm %s0, %s180
          %s182 = sshll.u32 %s173, 4
          %s183 = int_to_ptr.vmem [resolvable:$true] %s182
          %188 = dma.hbm_to_vmem [thread:$0]  %s181, 256, %s183, %s170, 384, 128, 8
        $region20: #{_linear_bias.1} parent=15 // pred_fallthru
          _
        // Predicated region
        $region21: #{_linear_bias.1} parent=15 // pred_check
          %p189 = pneg %p87
        $region22: #{_linear_bias.1} parent=15 // pred_check_branch
          %191 = sbr.rel (%p189) target = $region24
        $region23: #{_linear_bias.1} parent=15 // pred_region
          %s192 = sand.u32 %s77, 1
          %s193 = scalar_lea.sflag [#allocation7], %s192
          %s194 = sand.u32 %s77, 1
          %s195 = smul.addr %s194, 128
          %s196 = scalar_lea.vmem [#allocation6], %s195
          %s197 = smul.u32 16, %s27
          %s199 = ssub.s32 2048, 2048
          %200 = vsyncadd %s193, %s199
          %s201 = smul.addr %s197, 2
          %s202 = sadd.s32 %s26, %s201
          %s203 = smul.addr %s202, 128
          %s204 = scalar_lea.hbm %s1, %s203
          %s205 = sshll.u32 %s196, 4
          %s206 = int_to_ptr.vmem [resolvable:$true] %s205
          %211 = dma.hbm_to_vmem [thread:$0]  %s204, 2048, %s206, %s193, 256, 128, 8
        $region24: #{_linear_bias.1} parent=15 // pred_fallthru
          _
        // Predicated region
        $region25: #{_linear_bias.1} parent=15 // pred_check
          %p212 = pneg %p113
        $region26: #{_linear_bias.1} parent=15 // pred_check_branch
          %214 = sbr.rel (%p212) target = $region28
        $region27: #{_linear_bias.1} parent=15 // pred_region
          %p215 = scmp.lt.s32.totalorder %s26, 1
          %s216 = scalar_select %p215, %s26, 1
          %s217 = scalar_lea.vmem %s2, %s216
        $region28: #{_linear_bias.1} parent=15 // pred_fallthru
          _
      $region16: #{_linear_bias.1} parent=5 // pred_fallthru
        _
      %p218 = scmp.le.s32.totalorder 1, %s18
      %p219 = scmp.lt.s32.totalorder %s18, 7
      %p220 = pnand %p218, %p219
      %p221 = pneg %p220
      // Predicated region
      $region29: #{_linear_bias.1} parent=5 // pred_check
        _
      $region30: #{_linear_bias.1} parent=5 // pred_check_branch
        %223 = sbr.rel (%p220) target = $region32
      $region31: #{_linear_bias.1} parent=5 // pred_region
        %s224 = ssub.s32 %s18, 1
        %s225 = sand.u32 %s52, 1
        %s226 = scalar_lea.sflag [#allocation4], %s225
        %s227 = sand.u32 %s52, 1
        %s228 = smul.addr %s227, 16
        %s229 = scalar_lea.vmem [#allocation3], %s228
        // Predicated region
        $region33: #{_linear_bias.1} parent=31 // pred_check
          %p230 = pneg %p65
        $region34: #{_linear_bias.1} parent=31 // pred_check_branch
          %232 = sbr.rel (%p230) target = $region36
        $region35: #{_linear_bias.1} parent=31 // pred_region
          %233 = dma.done %s226, 256
        $region36: #{_linear_bias.1} parent=31 // pred_fallthru
          _
        %s234 = sand.u32 %s80, 1
        %s235 = scalar_lea.sflag [#allocation7], %s234
        %s236 = sand.u32 %s80, 1
        %s237 = smul.addr %s236, 128
        %s238 = scalar_lea.vmem [#allocation6], %s237
        // Predicated region
        $region37: #{_linear_bias.1} parent=31 // pred_check
          %p239 = pneg %p93
        $region38: #{_linear_bias.1} parent=31 // pred_check_branch
          %241 = sbr.rel (%p239) target = $region40
        $region39: #{_linear_bias.1} parent=31 // pred_region
          %242 = dma.done %s235, 2048
        $region40: #{_linear_bias.1} parent=31 // pred_fallthru
          _
        %s243 = sand.u32 %s52, 1
        %s244 = scalar_lea.sflag [#allocation4], %s243
        %s245 = sand.u32 %s52, 1
        %s246 = smul.addr %s245, 16
        %s247 = scalar_lea.vmem [#allocation3], %s246
        %p248 = pneg %p65
        %p249 = pneg %p62
        %s250 = sand.u32 %s80, 1
        %s251 = scalar_lea.sflag [#allocation7], %s250
        %s252 = sand.u32 %s80, 1
        %s253 = smul.addr %s252, 128
        %s254 = scalar_lea.vmem [#allocation6], %s253
        %p255 = pneg %p93
        %p256 = pneg %p90
        %p257 = scmp.lt.s32.totalorder %s29, 1
        %s258 = scalar_select %p257, %s29, 1
        %s259 = scalar_lea.vmem %s2, %s258
        %p260 = pneg %p119
        %p261 = pneg %p116
        %p262 = pneg %p147
        %p263 = pneg %p144
        %s264 = sand.u32 %s134, 1
        %s265 = scalar_lea.sflag [#allocation5], %s264
        %s266 = sand.u32 %s134, 1
        %s267 = smul.addr %s266, 16
        %s268 = scalar_lea.vmem [#allocation8], %s267
        %s269 = smul.u32 2, %s28
        %s270 = smul.u32 16, %s30
        %p271 = scmp.lt.s32.totalorder %s29, 1
        %s272 = scalar_select %p271, %s29, 1
        %s273 = scalar_lea.vmem %s2, %s272
        %s274 = smul.u32 2, %s28
        %p275 = scmp.eq.s32.totalorder %s30, 0
        // Predicated region
        $region41: #{_linear_bias.1} parent=31 // pred_check
          %p276 = pneg %p275
        $region42: #{_linear_bias.1} parent=31 // pred_check_branch
          %278 = sbr.rel (%p276) target = $region44
        $region43: #{_linear_bias.1} parent=31 // pred_region
          %279 = vst [vmem:[#allocation2] sm:$0xff] 0.0
          %280 = vst [vmem:[#allocation2 + $0x8] sm:$0xff] 0.0
        $region44: #{_linear_bias.1} parent=31 // pred_fallthru
          _
        %v281 = vld [vmem:[#allocation2] sm:$0xff]
        %v282 = vld [vmem:[#allocation2 + $0x8] sm:$0xff]
        %v283 = vld [vmem:[%s229] sm:$0xff]
        %v284 = vld [vmem:[%s229 + $0x8] sm:$0xff]
        %v285 = vld [vmem:[%s238] sm:$0xff]
        %v286 = vld [vmem:[%s238 + $0x8] sm:$0xff]
        %v287 = vld [vmem:[%s238 + $0x10] sm:$0xff]
        %v288 = vld [vmem:[%s238 + $0x18] sm:$0xff]
        %v289 = vld [vmem:[%s238 + $0x20] sm:$0xff]
        %v290 = vld [vmem:[%s238 + $0x28] sm:$0xff]
        %v291 = vld [vmem:[%s238 + $0x30] sm:$0xff]
        %v292 = vld [vmem:[%s238 + $0x38] sm:$0xff]
        %v293 = vld [vmem:[%s238 + $0x40] sm:$0xff]
        %v294 = vld [vmem:[%s238 + $0x48] sm:$0xff]
        %v295 = vld [vmem:[%s238 + $0x50] sm:$0xff]
        %v296 = vld [vmem:[%s238 + $0x58] sm:$0xff]
        %v297 = vld [vmem:[%s238 + $0x60] sm:$0xff]
        %v298 = vld [vmem:[%s238 + $0x68] sm:$0xff]
        %v299 = vld [vmem:[%s238 + $0x70] sm:$0xff]
        %v300 = vld [vmem:[%s238 + $0x78] sm:$0xff]
        %301 = vmatprep.subr.mxu0 0.0
        %302 = vmatpush1.msra.mxu0 %v285
        %303 = vmatprep.subr.mxu0 0.0
        %304 = vmatpush1.msra.mxu0 %v286
        %305 = vmatprep.subr.mxu0 0.0
        %306 = vmatpush1.msra.mxu0 %v287
        %307 = vmatprep.subr.mxu0 0.0
        %308 = vmatpush1.msra.mxu0 %v288
        %309 = vmatprep.subr.mxu0 0.0
        %310 = vmatpush1.msra.mxu0 %v289
        %311 = vmatprep.subr.mxu0 0.0
        %312 = vmatpush1.msra.mxu0 %v290
        %313 = vmatprep.subr.mxu0 0.0
        %314 = vmatpush1.msra.mxu0 %v291
        %315 = vmatprep.subr.mxu0 0.0
        %316 = vmatpush1.msra.mxu0 %v292
        %317 = vmatprep.subr.mxu0 0.0
        %318 = vmatpush1.msra.mxu0 %v293
        %319 = vmatprep.subr.mxu0 0.0
        %320 = vmatpush1.msra.mxu0 %v294
        %321 = vmatprep.subr.mxu0 0.0
        %322 = vmatpush1.msra.mxu0 %v295
        %323 = vmatprep.subr.mxu0 0.0
        %324 = vmatpush1.msra.mxu0 %v296
        %325 = vmatprep.subr.mxu0 0.0
        %326 = vmatpush1.msra.mxu0 %v297
        %327 = vmatprep.subr.mxu0 0.0
        %328 = vmatpush1.msra.mxu0 %v298
        %329 = vmatprep.subr.mxu0 0.0
        %330 = vmatpush1.msra.mxu0 %v299
        %331 = vmatprep.subr.mxu0 0.0
        %332 = vmatpush1.msra.mxu0 %v300
        %333 = vmatprep.subr.mxu0 0.0
        %334 = vmatpush1.msra.mxu0 0.0
        %335 = vmatprep.subr.mxu0 0.0
        %336 = vmatpush1.msra.mxu0 0.0
        %337 = vmatprep.subr.mxu0 0.0
        %338 = vmatpush1.msra.mxu0 0.0
        %339 = vmatprep.subr.mxu0 0.0
        %340 = vmatpush1.msra.mxu0 0.0
        %341 = vmatprep.subr.mxu0 0.0
        %342 = vmatpush1.msra.mxu0 0.0
        %343 = vmatprep.subr.mxu0 0.0
        %344 = vmatpush1.msra.mxu0 0.0
        %345 = vmatprep.subr.mxu0 0.0
        %346 = vmatpush1.msra.mxu0 0.0
        %347 = vmatprep.subr.mxu0 0.0
        %348 = vmatpush1.msra.mxu0 0.0
        %349 = vmatprep.subr.mxu0 0.0
        %350 = vmatpush1.msra.mxu0 0.0
        %351 = vmatprep.subr.mxu0 0.0
        %352 = vmatpush1.msra.mxu0 0.0
        %353 = vmatprep.subr.mxu0 0.0
        %354 = vmatpush1.msra.mxu0 0.0
        %355 = vmatprep.subr.mxu0 0.0
        %356 = vmatpush1.msra.mxu0 0.0
        %357 = vmatprep.subr.mxu0 0.0
        %358 = vmatpush1.msra.mxu0 0.0
        %359 = vmatprep.subr.mxu0 0.0
        %360 = vmatpush1.msra.mxu0 0.0
        %361 = vmatprep.subr.mxu0 0.0
        %362 = vmatpush1.msra.mxu0 0.0
        %363 = vmatprep.subr.mxu0 0.0
        %364 = vmatpush1.msra.mxu0 0.0
        %365 = vmatprep.mubr.f32.mxu0 0.0
        %366 = vmatmul.mubr.f32.gmra.mrb[0].mxu0 %v283
        %v367 = vpop.f32.mrb[0].mxu0
        %v368 = vadd.f32 0.0, %v367
        %v369 = vpop.f32.mrb[0].mxu0
        %370 = vmatprep.mubr.f32.mxu0 0.0
        %371 = vmatmul.mubr.f32.gmra.mrb[0].mxu0 %v284
        %v372 = vpop.f32.mrb[0].mxu0
        %v373 = vadd.f32 0.0, %v372
        %v374 = vpop.f32.mrb[0].mxu0
        %375 = vdwg.mxu0
        %v376 = vadd.f32 %v281, %v368
        %v377 = vadd.f32 %v282, %v373
        %378 = vst [vmem:[#allocation2] sm:$0xff] %v376
        %379 = vst [vmem:[#allocation2 + $0x8] sm:$0xff] %v377
        %p380 = scmp.eq.s32.totalorder %s30, 2
        // Predicated region
        $region45: #{_linear_bias.1} parent=31 // pred_check
          %p381 = pneg %p380
        $region46: #{_linear_bias.1} parent=31 // pred_check_branch
          %383 = sbr.rel (%p381) target = $region48
        $region47: #{_linear_bias.1} parent=31 // pred_region
          %v384 = vld [vmem:[#allocation2] sm:$0xff]
          %v385 = vld [vmem:[#allocation2 + $0x8] sm:$0xff]
          %v386 = vld [vmem:[%s273] sm:$0x1]
          %v388 = vlaneseq
          %v389 = vshrl.u32 %v388, 7
          %v390 = vsub.s32 0, %v389
          %v391 = vrot.slane %v386, %v390
          %v393 = vadd.f32 %v384, %v391
          %v394 = vadd.f32 %v385, %v391
          %395 = vst [vmem:[%s268] sm:$0xff] %v393
          %396 = vst [vmem:[%s268 + $0x8] sm:$0xff] %v394
        $region48: #{_linear_bias.1} parent=31 // pred_fallthru
          _
        %s397 = sand.u32 %s134, 1
        %s398 = scalar_lea.sflag [#allocation5], %s397
        %s399 = sand.u32 %s134, 1
        %s400 = smul.addr %s399, 16
        %s401 = scalar_lea.vmem [#allocation8], %s400
        // Predicated region
        $region49: #{_linear_bias.1} parent=31 // pred_check
          %p402 = pneg %p144
        $region50: #{_linear_bias.1} parent=31 // pred_check_branch
          %404 = sbr.rel (%p402) target = $region52
        $region51: #{_linear_bias.1} parent=31 // pred_region
          %s405 = smul.u32 2, %s28
          %s407 = ssub.s32 256, 256
          %408 = vsyncadd %s398, %s407
          %s409 = smul.addr %s405, 2
          %s410 = sadd.s32 %s29, %s409
          %s411 = smul.addr %s410, 128
          %s412 = scalar_lea.hbm %s3, %s411
          %s413 = sshll.u32 %s401, 4
          %s414 = int_to_ptr.vmem [resolvable:$true] %s413
          %419 = dma.vmem_to_hbm [thread:$0]  %s414, 256, %s412, %s398, 128, 256, 8
        $region52: #{_linear_bias.1} parent=31 // pred_fallthru
          _
      $region32: #{_linear_bias.1} parent=5 // pred_fallthru
        _
      %p420 = scmp.le.s32.totalorder 2, %s18
      // Predicated region
      $region53: #{_linear_bias.1} parent=5 // pred_check
        %p421 = pneg %p420
      $region54: #{_linear_bias.1} parent=5 // pred_check_branch
        %423 = sbr.rel (%p421) target = $region56
      $region55: #{_linear_bias.1} parent=5 // pred_region
        %s424 = ssub.s32 %s18, 2
        // Predicated region
        $region57: #{_linear_bias.1} parent=55 // pred_check
          %p425 = pneg %p150
        $region58: #{_linear_bias.1} parent=55 // pred_check_branch
          %427 = sbr.rel (%p425) target = $region60
        $region59: #{_linear_bias.1} parent=55 // pred_region
          %s428 = sand.u32 %s135, 1
          %s429 = scalar_lea.sflag [#allocation5], %s428
          %s430 = sand.u32 %s135, 1
          %s431 = smul.addr %s430, 16
          %s432 = scalar_lea.vmem [#allocation8], %s431
          %433 = dma.done %s429, 256
        $region60: #{_linear_bias.1} parent=55 // pred_fallthru
          _
      $region56: #{_linear_bias.1} parent=5 // pred_fallthru
        _
    $region6: #{_linear_bias.1} parent=1 // loop_footer
      %s22 = sadd.s32 1, %s18
    $region7: #{_linear_bias.1} parent=1 // loop_footer_branch
      %17 = sbr.rel target = $region3
    $region8: #{_linear_bias.1} parent=1 // loop_exit
      _
    %434 = vsyncpa [#allocation4], 1
    %s435 = scalar_lea.sflag [#allocation4], 1
    %436 = vsyncpa %s435, 1
    %437 = vsyncpa [#allocation7], 1
    %s438 = scalar_lea.sflag [#allocation7], 1
    %439 = vsyncpa %s438, 1
    %440 = vsyncpa [#allocation5], 1
    %s441 = scalar_lea.sflag [#allocation5], 1
    %442 = vsyncpa %s441, 1

</llo_original>
